<compile_context>
chip_gen: v6e
topology: v6e:2x2x1
jax: 0.10.0
libtpu: 0.0.40
codegen_flags: <defaults>
</compile_context>

<pallas_src>
import functools

import jax
import jax.numpy as jnp
from jax.experimental import pallas as pl
from jax.experimental.pallas import tpu as pltpu

IN_FEATURES = 19       # startBlock input features
POLICY_OUT = 13        # policy head output width
VALUE_OUT = 1          # value head output width
LANE = 128             # TPU lane width
SUBLANE_ALIGN = 16     # bf16 sublane packing -> batch tiles are multiples of 16
DEFAULT_TILE_B = 1024  # batch tile (sweep 512-2048); amortizes per-step overhead


def _round_up(x, m):
    return (x + m - 1) // m * m


def _cdiv(a, b):
    return (a + b - 1) // b


def make_neuronet_kernel(num_resblocks):
    """Builds the Pallas kernel closure for a given number of ResBlocks."""

    def kernel(*refs):
        it = iter(refs)
        x_ref = next(it)
        start_w, start_b = next(it), next(it)
        if num_resblocks > 0:
            res_w, res_b = next(it), next(it)
        head_w1, head_b1, head_w2, head_b2 = next(it), next(it), next(it), next(it)
        out_ref = next(it)

        def linear(h_bf16, w_bf16, b_f32):
            # bf16 operands at the MXU boundary, f32 accumulation + f32 bias add.
            return jnp.dot(h_bf16, w_bf16, preferred_element_type=jnp.float32) + b_f32

        # Zero-extend the 19 input lanes to a lane-dense 128-wide bf16 tile
        # (explicit zeros: VMEM tile padding content is not guaranteed).
        x = x_ref[...]                                            # (tb, 19) bf16
        pad = jnp.zeros((x.shape[0], LANE - IN_FEATURES), x.dtype)
        h = jnp.concatenate([x, pad], axis=-1)                    # (tb, 128) bf16

        # startBlock: Linear(19 -> H) + ReLU (lane-padded; padded lanes stay 0).
        h = jnp.maximum(linear(h, start_w[...], start_b[...]), 0.0)
        h = h.astype(jnp.bfloat16)

        # backBone: ResBlocks (Linear -> ReLU -> Linear -> +residual -> ReLU).
        for r in range(num_resblocks):
            residual = h                                          # bf16
            t = jnp.maximum(linear(h, res_w[2 * r], res_b[2 * r]), 0.0)
            t = t.astype(jnp.bfloat16)
            h = jnp.maximum(
                linear(t, res_w[2 * r + 1], res_b[2 * r + 1])
                + residual.astype(jnp.float32),
                0.0,
            )
            h = h.astype(jnp.bfloat16)

        # Fused policy + value heads -> one lane-dense (tb, 128) output slab
        # (cols 0..12 = policy logits, col 13 = pre-tanh value, rest = 0).
        hh = jnp.maximum(linear(h, head_w1[...], head_b1[...]), 0.0)
        hh = hh.astype(jnp.bfloat16)                              # (tb, 2*HP)
        out = linear(hh, head_w2[...], head_b2[...])              # (tb, 128) f32

        # Pure lane-dense bf16 store; tanh on the value column is done in the wrapper.
        out_ref[...] = out.astype(out_ref.dtype)

    return kernel


def init_params(key, num_resblocks, num_hidden):
    """PyTorch-style (uniform +-1/sqrt(fan_in)) init, f32, unfused/unpadded.

    Returns a list of (w, b) tuples, w shape (in, out), b shape (1, out), in the
    order: start, [res w1, res w2]*, policy1, policy2, value1, value2.
    """

    def linear_params(k, fan_in, fan_out):
        kw, kb = jax.random.split(k)
        bound = 1.0 / jnp.sqrt(jnp.float32(fan_in))
        w = jax.random.uniform(kw, (fan_in, fan_out), jnp.float32, -bound, bound)
        b = jax.random.uniform(kb, (1, fan_out), jnp.float32, -bound, bound)
        return w, b

    n_linear = 1 + 2 * num_resblocks + 2 + 2
    keys = jax.random.split(key, n_linear)
    ki = iter(keys)

    params = [linear_params(next(ki), IN_FEATURES, num_hidden)]
    for _ in range(num_resblocks):
        params.append(linear_params(next(ki), num_hidden, num_hidden))
        params.append(linear_params(next(ki), num_hidden, num_hidden))
    params.append(linear_params(next(ki), num_hidden, num_hidden))     # policy 1
    params.append(linear_params(next(ki), num_hidden, POLICY_OUT))     # policy 2
    params.append(linear_params(next(ki), num_hidden, num_hidden))     # value 1
    params.append(linear_params(next(ki), num_hidden, VALUE_OUT))      # value 2
    return params


def pack_params(params, num_resblocks, num_hidden):
    """Pad to 128 lanes, stack resblock weights, fuse heads, cast weights to bf16."""
    H = num_hidden
    HP = _round_up(H, LANE)

    def pad_w(w, rows, cols):
        return jnp.zeros((rows, cols), jnp.float32).at[: w.shape[0], : w.shape[1]].set(w)

    def pad_b(b, cols):
        return jnp.zeros((1, cols), jnp.float32).at[:, : b.shape[1]].set(b)

    it = iter(params)
    sw, sb = next(it)
    # x is zero-extended to 128 lanes in-kernel, so the start weight is (128, HP).
    start_w = pad_w(sw, LANE, HP).astype(jnp.bfloat16)
    start_b = pad_b(sb, HP)

    res_ws, res_bs = [], []
    for _ in range(num_resblocks):
        w1, b1 = next(it)
        w2, b2 = next(it)
        res_ws += [pad_w(w1, HP, HP), pad_w(w2, HP, HP)]
        res_bs += [pad_b(b1, HP), pad_b(b2, HP)]

    pw1, pb1 = next(it)
    pw2, pb2 = next(it)
    vw1, vb1 = next(it)
    vw2, vb2 = next(it)

    # Fused head layer 1: (HP, 2*HP) = [policy branch | value branch].
    hw1 = jnp.zeros((HP, 2 * HP), jnp.float32)
    hw1 = hw1.at[:H, :H].set(pw1).at[:H, HP:HP + H].set(vw1)
    hb1 = jnp.zeros((1, 2 * HP), jnp.float32)
    hb1 = hb1.at[:, :H].set(pb1).at[:, HP:HP + H].set(vb1)

    # Fused head layer 2 (block-diagonal): (2*HP, 128); cols 0..12 policy, col 13 value.
    hw2 = jnp.zeros((2 * HP, LANE), jnp.float32)
    hw2 = hw2.at[:H, :POLICY_OUT].set(pw2)
    hw2 = hw2.at[HP:HP + H, POLICY_OUT:POLICY_OUT + VALUE_OUT].set(vw2)
    hb2 = jnp.zeros((1, LANE), jnp.float32)
    hb2 = hb2.at[:, :POLICY_OUT].set(pb2)
    hb2 = hb2.at[:, POLICY_OUT:POLICY_OUT + VALUE_OUT].set(vb2)

    packed = [start_w, start_b]
    if num_resblocks > 0:
        # TODO(synk): on v7x with large num_hidden, store the stacked resblock
        # weights in fp8 (bf16 activations, f32 accumulation) to halve VMEM.
        packed += [
            jnp.stack(res_ws).astype(jnp.bfloat16),   # (2R, HP, HP)
            jnp.stack(res_bs),                        # (2R, 1, HP)  f32
        ]
    packed += [hw1.astype(jnp.bfloat16), hb1, hw2.astype(jnp.bfloat16), hb2]
    return tuple(packed)


@functools.partial(
    jax.jit, static_argnames=("num_resblocks", "num_hidden", "tile_b")
)
def neuronet_forward(x, packed_params, num_resblocks, num_hidden, tile_b=DEFAULT_TILE_B):
    batch = x.shape[0]
    HP = _round_up(num_hidden, LANE)

    # Balanced batch tiling (minimal padding); >=2 tiles for moderate batches so
    # v7x's second TensorCore gets work (no effect on single-TC v5e/v6e).
    num_tiles = max(1, _cdiv(batch, tile_b))
    if num_tiles < 2 and batch >= 256:
        num_tiles = 2
    tb = _round_up(_cdiv(batch, num_tiles), SUBLANE_ALIGN)
    b_pad = tb * num_tiles

    # Unpadded (batch, 19) bf16 input: no wrapper-materialized 128-lane f32 pad.
    x_bf = x.astype(jnp.bfloat16)
    if b_pad != batch:
        x_bf = jnp.pad(x_bf, ((0, b_pad - batch), (0, 0)))

    def const_spec(arr):
        # Constant block index across the grid -> weight stays VMEM-resident.
        # TODO(synk): add pipeline_mode=pl.Buffered(1) for very large num_hidden
        # to halve resident weight VMEM (irrelevant at these sizes).
        return pl.BlockSpec(arr.shape, lambda i, n=arr.ndim: (0,) * n)

    in_specs = [pl.BlockSpec((tb, IN_FEATURES), lambda i: (i, 0))]
    in_specs += [const_spec(p) for p in packed_params]
    out_specs = pl.BlockSpec((tb, LANE), lambda i: (i, 0))
    out_shape = jax.ShapeDtypeStruct((b_pad, LANE), jnp.bfloat16)

    # Advisory cost estimate so XLA schedules the custom call vs. surrounding ops.
    flops = 2 * b_pad * (
        LANE * HP
        + 2 * num_resblocks * HP * HP
        + HP * (2 * HP)
        + (2 * HP) * LANE
    )
    bytes_accessed = (
        b_pad * IN_FEATURES * 2                       # bf16 input
        + b_pad * LANE * 2                            # bf16 output
        + sum(int(p.size) * p.dtype.itemsize for p in packed_params)
    )

    # VMEM note: at tb=1024 the double-buffered in/out tiles plus intermediates
    # are well under 16 MiB, so no vmem_limit_bytes override is needed (v5e-safe).
    out = pl.pallas_call(
        make_neuronet_kernel(num_resblocks),
        out_shape=out_shape,
        grid_spec=pl.GridSpec(
            grid=(num_tiles,),
            in_specs=in_specs,
            out_specs=out_specs,
        ),
        compiler_params=pltpu.CompilerParams(
            dimension_semantics=("parallel",),
        ),
        cost_estimate=pl.CostEstimate(
            flops=flops, transcendentals=0, bytes_accessed=bytes_accessed
        ),
    )(x_bf, *packed_params)

    # Slice, upcast, and apply tanh only to the value column in the wrapper
    # (avoids 128x-redundant in-kernel EUP transcendentals).
    out_f32 = out[:batch].astype(jnp.float32)
    policy = out_f32[:, :POLICY_OUT]
    value = jnp.tanh(out_f32[:, POLICY_OUT:POLICY_OUT + VALUE_OUT])
    return policy, value


def neuronet_reference(x, params, num_resblocks):
    """Plain-JAX f32 reference matching the PyTorch forward semantics."""
    it = iter(params)
    sw, sb = next(it)
    h = jax.nn.relu(x @ sw + sb)
    for _ in range(num_resblocks):
        w1, b1 = next(it)
        w2, b2 = next(it)
        r = h
        h = jax.nn.relu(h @ w1 + b1)
        h = jax.nn.relu(h @ w2 + b2 + r)
    pw1, pb1 = next(it)
    pw2, pb2 = next(it)
    vw1, vb1 = next(it)
    vw2, vb2 = next(it)
    policy = jax.nn.relu(h @ pw1 + pb1) @ pw2 + pb2
    value = jnp.tanh(jax.nn.relu(h @ vw1 + vb1) @ vw2 + vb2)
    return policy, value


if __name__ == "__main__":
    num_resblocks = 2
    num_hidden = 32
    batch = 8

    key = jax.random.PRNGKey(0)
    kx, kp = jax.random.split(key)
    x = jax.random.normal(kx, (batch, IN_FEATURES), dtype=jnp.float32)

    params = init_params(kp, num_resblocks, num_hidden)
    packed = pack_params(params, num_resblocks, num_hidden)

    policy, value = neuronet_forward(x, packed, num_resblocks, num_hidden)
    jax.block_until_ready((policy, value))

    ref_policy, ref_value = neuronet_reference(x, params, num_resblocks)
    assert policy.shape == (batch, POLICY_OUT)
    assert value.shape == (batch, VALUE_OUT)
    # bf16 weights/activations/output with f32 accumulation vs f32 reference.
    assert jnp.allclose(policy, ref_policy, atol=5e-2, rtol=5e-2), float(
        jnp.max(jnp.abs(policy - ref_policy))
    )
    assert jnp.allclose(value, ref_value, atol=5e-2, rtol=5e-2), float(
        jnp.max(jnp.abs(value - ref_value))
    )

    print("KERNEL_OK")
</pallas_src>

<mosaic_0001>
module attributes {stable_mosaic.version = 11 : i64} {
  func.func @kernel(%arg0: i32, %arg1: memref<16x19xbf16, #tpu.memory_space<vmem>>, %arg2: memref<128x128xbf16, #tpu.memory_space<vmem>>, %arg3: memref<1x128xf32, #tpu.memory_space<vmem>>, %arg4: memref<4x128x128xbf16, #tpu.memory_space<vmem>>, %arg5: memref<4x1x128xf32, #tpu.memory_space<vmem>>, %arg6: memref<128x256xbf16, #tpu.memory_space<vmem>>, %arg7: memref<1x256xf32, #tpu.memory_space<vmem>>, %arg8: memref<256x128xbf16, #tpu.memory_space<vmem>>, %arg9: memref<1x128xf32, #tpu.memory_space<vmem>>, %arg10: memref<16x128xbf16, #tpu.memory_space<vmem>>) attributes {dimension_semantics = [#tpu.dimension_semantics<parallel>], iteration_bounds = array<i64: 1>, scalar_prefetch = 0 : i64, scratch_operands = 0 : i64, tpu.core_type = #tpu.core_type<tc>, window_params = [{transform_indices = @transform_0, window_bounds = array<i64: 16, 19>}, {pipeline_mode = #tpu.pipeline_mode<synchronous>, transform_indices = @transform_1, window_bounds = array<i64: 128, 128>}, {pipeline_mode = #tpu.pipeline_mode<synchronous>, transform_indices = @transform_2, window_bounds = array<i64: 1, 128>}, {pipeline_mode = #tpu.pipeline_mode<synchronous>, transform_indices = @transform_3, window_bounds = array<i64: 4, 128, 128>}, {pipeline_mode = #tpu.pipeline_mode<synchronous>, transform_indices = @transform_4, window_bounds = array<i64: 4, 1, 128>}, {pipeline_mode = #tpu.pipeline_mode<synchronous>, transform_indices = @transform_5, window_bounds = array<i64: 128, 256>}, {pipeline_mode = #tpu.pipeline_mode<synchronous>, transform_indices = @transform_6, window_bounds = array<i64: 1, 256>}, {pipeline_mode = #tpu.pipeline_mode<synchronous>, transform_indices = @transform_7, window_bounds = array<i64: 256, 128>}, {pipeline_mode = #tpu.pipeline_mode<synchronous>, transform_indices = @transform_8, window_bounds = array<i64: 1, 128>}, {transform_indices = @transform_9, window_bounds = array<i64: 16, 128>}]} {
    %c0 = arith.constant 0 : index
    %c0_0 = arith.constant 0 : index
    %0 = vector.load %arg1[%c0, %c0_0] : memref<16x19xbf16, #tpu.memory_space<vmem>>, vector<16x19xbf16>
    %cst = arith.constant 0.000000e+00 : bf16
    %1 = vector.broadcast %cst : bf16 to vector<16x109xbf16>
    %2 = tpu.concatenate %0, %1 in 1 : vector<16x19xbf16>, vector<16x109xbf16> -> vector<16x128xbf16>
    %c0_1 = arith.constant 0 : index
    %c0_2 = arith.constant 0 : index
    %3 = vector.load %arg2[%c0_1, %c0_2] : memref<128x128xbf16, #tpu.memory_space<vmem>>, vector<128x128xbf16>
    %c0_3 = arith.constant 0 : index
    %c0_4 = arith.constant 0 : index
    %4 = vector.load %arg3[%c0_3, %c0_4] : memref<1x128xf32, #tpu.memory_space<vmem>>, vector<1x128xf32>
    %cst_5 = arith.constant dense<0.000000e+00> : vector<16x128xf32>
    %5 = tpu.matmul %2, %3, %cst_5 {dimension_numbers = #tpu.dot_dimension_numbers<[1], [0], [0], [1], [0, 0, 1, 1], [], []>} : vector<16x128xbf16>, vector<128x128xbf16>, vector<16x128xf32> -> vector<16x128xf32>
    %6 = vector.broadcast %4 : vector<1x128xf32> to vector<16x128xf32>
    %7 = arith.addf %5, %6 : vector<16x128xf32>
    %cst_6 = arith.constant 0.000000e+00 : f32
    %8 = vector.broadcast %cst_6 : f32 to vector<16x128xf32>
    %9 = arith.maximumf %7, %8 : vector<16x128xf32>
    %10 = arith.truncf %9 : vector<16x128xf32> to vector<16x128xbf16>
    %c0_7 = arith.constant 0 : index
    %c0_8 = arith.constant 0 : index
    %c0_9 = arith.constant 0 : index
    %11 = vector.load %arg4[%c0_7, %c0_8, %c0_9] : memref<4x128x128xbf16, #tpu.memory_space<vmem>>, vector<1x128x128xbf16>
    %12 = vector.shape_cast %11 : vector<1x128x128xbf16> to vector<128x128xbf16>
    %c0_10 = arith.constant 0 : index
    %c0_11 = arith.constant 0 : index
    %c0_12 = arith.constant 0 : index
    %13 = vector.load %arg5[%c0_10, %c0_11, %c0_12] : memref<4x1x128xf32, #tpu.memory_space<vmem>>, vector<1x1x128xf32>
    %14 = vector.shape_cast %13 : vector<1x1x128xf32> to vector<1x128xf32>
    %cst_13 = arith.constant dense<0.000000e+00> : vector<16x128xf32>
    %15 = tpu.matmul %10, %12, %cst_13 {dimension_numbers = #tpu.dot_dimension_numbers<[1], [0], [0], [1], [0, 0, 1, 1], [], []>} : vector<16x128xbf16>, vector<128x128xbf16>, vector<16x128xf32> -> vector<16x128xf32>
    %16 = vector.broadcast %14 : vector<1x128xf32> to vector<16x128xf32>
    %17 = arith.addf %15, %16 : vector<16x128xf32>
    %cst_14 = arith.constant 0.000000e+00 : f32
    %18 = vector.broadcast %cst_14 : f32 to vector<16x128xf32>
    %19 = arith.maximumf %17, %18 : vector<16x128xf32>
    %20 = arith.truncf %19 : vector<16x128xf32> to vector<16x128xbf16>
    %c1 = arith.constant 1 : index
    %c0_15 = arith.constant 0 : index
    %c0_16 = arith.constant 0 : index
    %21 = vector.load %arg4[%c1, %c0_15, %c0_16] : memref<4x128x128xbf16, #tpu.memory_space<vmem>>, vector<1x128x128xbf16>
    %22 = vector.shape_cast %21 : vector<1x128x128xbf16> to vector<128x128xbf16>
    %c1_17 = arith.constant 1 : index
    %c0_18 = arith.constant 0 : index
    %c0_19 = arith.constant 0 : index
    %23 = vector.load %arg5[%c1_17, %c0_18, %c0_19] : memref<4x1x128xf32, #tpu.memory_space<vmem>>, vector<1x1x128xf32>
    %24 = vector.shape_cast %23 : vector<1x1x128xf32> to vector<1x128xf32>
    %cst_20 = arith.constant dense<0.000000e+00> : vector<16x128xf32>
    %25 = tpu.matmul %20, %22, %cst_20 {dimension_numbers = #tpu.dot_dimension_numbers<[1], [0], [0], [1], [0, 0, 1, 1], [], []>} : vector<16x128xbf16>, vector<128x128xbf16>, vector<16x128xf32> -> vector<16x128xf32>
    %26 = vector.broadcast %24 : vector<1x128xf32> to vector<16x128xf32>
    %27 = arith.addf %25, %26 : vector<16x128xf32>
    %28 = arith.extf %10 : vector<16x128xbf16> to vector<16x128xf32>
    %29 = arith.addf %27, %28 : vector<16x128xf32>
    %cst_21 = arith.constant 0.000000e+00 : f32
    %30 = vector.broadcast %cst_21 : f32 to vector<16x128xf32>
    %31 = arith.maximumf %29, %30 : vector<16x128xf32>
    %32 = arith.truncf %31 : vector<16x128xf32> to vector<16x128xbf16>
    %c2 = arith.constant 2 : index
    %c0_22 = arith.constant 0 : index
    %c0_23 = arith.constant 0 : index
    %33 = vector.load %arg4[%c2, %c0_22, %c0_23] : memref<4x128x128xbf16, #tpu.memory_space<vmem>>, vector<1x128x128xbf16>
    %34 = vector.shape_cast %33 : vector<1x128x128xbf16> to vector<128x128xbf16>
    %c2_24 = arith.constant 2 : index
    %c0_25 = arith.constant 0 : index
    %c0_26 = arith.constant 0 : index
    %35 = vector.load %arg5[%c2_24, %c0_25, %c0_26] : memref<4x1x128xf32, #tpu.memory_space<vmem>>, vector<1x1x128xf32>
    %36 = vector.shape_cast %35 : vector<1x1x128xf32> to vector<1x128xf32>
    %cst_27 = arith.constant dense<0.000000e+00> : vector<16x128xf32>
    %37 = tpu.matmul %32, %34, %cst_27 {dimension_numbers = #tpu.dot_dimension_numbers<[1], [0], [0], [1], [0, 0, 1, 1], [], []>} : vector<16x128xbf16>, vector<128x128xbf16>, vector<16x128xf32> -> vector<16x128xf32>
    %38 = vector.broadcast %36 : vector<1x128xf32> to vector<16x128xf32>
    %39 = arith.addf %37, %38 : vector<16x128xf32>
    %cst_28 = arith.constant 0.000000e+00 : f32
    %40 = vector.broadcast %cst_28 : f32 to vector<16x128xf32>
    %41 = arith.maximumf %39, %40 : vector<16x128xf32>
    %42 = arith.truncf %41 : vector<16x128xf32> to vector<16x128xbf16>
    %c3 = arith.constant 3 : index
    %c0_29 = arith.constant 0 : index
    %c0_30 = arith.constant 0 : index
    %43 = vector.load %arg4[%c3, %c0_29, %c0_30] : memref<4x128x128xbf16, #tpu.memory_space<vmem>>, vector<1x128x128xbf16>
    %44 = vector.shape_cast %43 : vector<1x128x128xbf16> to vector<128x128xbf16>
    %c3_31 = arith.constant 3 : index
    %c0_32 = arith.constant 0 : index
    %c0_33 = arith.constant 0 : index
    %45 = vector.load %arg5[%c3_31, %c0_32, %c0_33] : memref<4x1x128xf32, #tpu.memory_space<vmem>>, vector<1x1x128xf32>
    %46 = vector.shape_cast %45 : vector<1x1x128xf32> to vector<1x128xf32>
    %cst_34 = arith.constant dense<0.000000e+00> : vector<16x128xf32>
    %47 = tpu.matmul %42, %44, %cst_34 {dimension_numbers = #tpu.dot_dimension_numbers<[1], [0], [0], [1], [0, 0, 1, 1], [], []>} : vector<16x128xbf16>, vector<128x128xbf16>, vector<16x128xf32> -> vector<16x128xf32>
    %48 = vector.broadcast %46 : vector<1x128xf32> to vector<16x128xf32>
    %49 = arith.addf %47, %48 : vector<16x128xf32>
    %50 = arith.extf %32 : vector<16x128xbf16> to vector<16x128xf32>
    %51 = arith.addf %49, %50 : vector<16x128xf32>
    %cst_35 = arith.constant 0.000000e+00 : f32
    %52 = vector.broadcast %cst_35 : f32 to vector<16x128xf32>
    %53 = arith.maximumf %51, %52 : vector<16x128xf32>
    %54 = arith.truncf %53 : vector<16x128xf32> to vector<16x128xbf16>
    %c0_36 = arith.constant 0 : index
    %c0_37 = arith.constant 0 : index
    %55 = vector.load %arg6[%c0_36, %c0_37] : memref<128x256xbf16, #tpu.memory_space<vmem>>, vector<128x256xbf16>
    %c0_38 = arith.constant 0 : index
    %c0_39 = arith.constant 0 : index
    %56 = vector.load %arg7[%c0_38, %c0_39] : memref<1x256xf32, #tpu.memory_space<vmem>>, vector<1x256xf32>
    %cst_40 = arith.constant dense<0.000000e+00> : vector<16x256xf32>
    %57 = tpu.matmul %54, %55, %cst_40 {dimension_numbers = #tpu.dot_dimension_numbers<[1], [0], [0], [1], [0, 0, 1, 1], [], []>} : vector<16x128xbf16>, vector<128x256xbf16>, vector<16x256xf32> -> vector<16x256xf32>
    %58 = vector.broadcast %56 : vector<1x256xf32> to vector<16x256xf32>
    %59 = arith.addf %57, %58 : vector<16x256xf32>
    %cst_41 = arith.constant 0.000000e+00 : f32
    %60 = vector.broadcast %cst_41 : f32 to vector<16x256xf32>
    %61 = arith.maximumf %59, %60 : vector<16x256xf32>
    %62 = arith.truncf %61 : vector<16x256xf32> to vector<16x256xbf16>
    %c0_42 = arith.constant 0 : index
    %c0_43 = arith.constant 0 : index
    %63 = vector.load %arg8[%c0_42, %c0_43] : memref<256x128xbf16, #tpu.memory_space<vmem>>, vector<256x128xbf16>
    %c0_44 = arith.constant 0 : index
    %c0_45 = arith.constant 0 : index
    %64 = vector.load %arg9[%c0_44, %c0_45] : memref<1x128xf32, #tpu.memory_space<vmem>>, vector<1x128xf32>
    %cst_46 = arith.constant dense<0.000000e+00> : vector<16x128xf32>
    %65 = tpu.matmul %62, %63, %cst_46 {dimension_numbers = #tpu.dot_dimension_numbers<[1], [0], [0], [1], [0, 0, 1, 1], [], []>} : vector<16x256xbf16>, vector<256x128xbf16>, vector<16x128xf32> -> vector<16x128xf32>
    %66 = vector.broadcast %64 : vector<1x128xf32> to vector<16x128xf32>
    %67 = arith.addf %65, %66 : vector<16x128xf32>
    %68 = arith.truncf %67 : vector<16x128xf32> to vector<16x128xbf16>
    %c0_47 = arith.constant 0 : index
    %c0_48 = arith.constant 0 : index
    %69 = vector.load %arg10[%c0_47, %c0_48] : memref<16x128xbf16, #tpu.memory_space<vmem>>, vector<16x128xbf16>
    tpu.vector_store %arg10[%c0_47, %c0_48], %68 {strides = array<i32>} : memref<16x128xbf16, #tpu.memory_space<vmem>>, vector<16x128xbf16>,
    return
  }
  func.func @transform_0(%arg0: i32) -> (i32, i32) {
    %c0_i32 = arith.constant 0 : i32
    %c0_i32_0 = arith.constant 0 : i32
    return %arg0, %c0_i32 : i32, i32
  }
  func.func @transform_1(%arg0: i32) -> (i32, i32) {
    %c0_i32 = arith.constant 0 : i32
    %c0_i32_0 = arith.constant 0 : i32
    %c0_i32_1 = arith.constant 0 : i32
    return %c0_i32, %c0_i32_0 : i32, i32
  }
  func.func @transform_2(%arg0: i32) -> (i32, i32) {
    %c0_i32 = arith.constant 0 : i32
    %c0_i32_0 = arith.constant 0 : i32
    %c0_i32_1 = arith.constant 0 : i32
    return %c0_i32, %c0_i32_0 : i32, i32
  }
  func.func @transform_3(%arg0: i32) -> (i32, i32, i32) {
    %c0_i32 = arith.constant 0 : i32
    %c0_i32_0 = arith.constant 0 : i32
    %c0_i32_1 = arith.constant 0 : i32
    %c0_i32_2 = arith.constant 0 : i32
    return %c0_i32, %c0_i32_0, %c0_i32_1 : i32, i32, i32
  }
  func.func @transform_4(%arg0: i32) -> (i32, i32, i32) {
    %c0_i32 = arith.constant 0 : i32
    %c0_i32_0 = arith.constant 0 : i32
    %c0_i32_1 = arith.constant 0 : i32
    %c0_i32_2 = arith.constant 0 : i32
    return %c0_i32, %c0_i32_0, %c0_i32_1 : i32, i32, i32
  }
  func.func @transform_5(%arg0: i32) -> (i32, i32) {
    %c0_i32 = arith.constant 0 : i32
    %c0_i32_0 = arith.constant 0 : i32
    %c0_i32_1 = arith.constant 0 : i32
    return %c0_i32, %c0_i32_0 : i32, i32
  }
  func.func @transform_6(%arg0: i32) -> (i32, i32) {
    %c0_i32 = arith.constant 0 : i32
    %c0_i32_0 = arith.constant 0 : i32
    %c0_i32_1 = arith.constant 0 : i32
    return %c0_i32, %c0_i32_0 : i32, i32
  }
  func.func @transform_7(%arg0: i32) -> (i32, i32) {
    %c0_i32 = arith.constant 0 : i32
    %c0_i32_0 = arith.constant 0 : i32
    %c0_i32_1 = arith.constant 0 : i32
    return %c0_i32, %c0_i32_0 : i32, i32
  }
  func.func @transform_8(%arg0: i32) -> (i32, i32) {
    %c0_i32 = arith.constant 0 : i32
    %c0_i32_0 = arith.constant 0 : i32
    %c0_i32_1 = arith.constant 0 : i32
    return %c0_i32, %c0_i32_0 : i32, i32
  }
  func.func @transform_9(%arg0: i32) -> (i32, i32) {
    %c0_i32 = arith.constant 0 : i32
    %c0_i32_0 = arith.constant 0 : i32
    return %arg0, %c0_i32 : i32, i32
  }
}

</mosaic_0001>

<llo_original>
// kernel: neuronet_forward.1
$region0: #{neuronet_forward.1}
  #allocation0 [shape = 'u32[]', space=smem, size = 0x4, offset = 0x4, fixed_abs, tag = 'smem constant byte address 0x4 - core index']
  #allocation1 [shape = 'u32[144,128]{1,0:T(1,128)}', space=vmem, size = 0x12000, scoped, tag = 'internal scratch']
  %s0 = inlined_call_operand.vmem [shape: bf16[16,19], index: 0, kind: input, shape index: {}]
  %s1 = inlined_call_operand.hbm [shape: bf16[128,128], index: 1, kind: input, shape index: {}]
  %s2 = inlined_call_operand.vmem [shape: f32[1,128], index: 2, kind: input, shape index: {}]
  %s3 = inlined_call_operand.hbm [shape: bf16[4,128,128], index: 3, kind: input, shape index: {}]
  %s4 = inlined_call_operand.vmem [shape: f32[4,1,128], index: 4, kind: input, shape index: {}]
  %s5 = inlined_call_operand.hbm [shape: bf16[128,256], index: 5, kind: input, shape index: {}]
  %s6 = inlined_call_operand.vmem [shape: f32[1,256], index: 6, kind: input, shape index: {}]
  %s7 = inlined_call_operand.hbm [shape: bf16[256,128], index: 7, kind: input, shape index: {}]
  %s8 = inlined_call_operand.vmem [shape: f32[1,128], index: 8, kind: input, shape index: {}]
  %s9 = inlined_call_operand.vmem [shape: bf16[16,128], index: 9, kind: output, shape index: {}]
  %s10 = sld [smem:[#allocation0]]
  $region62: #{neuronet_forward.1} parent=0
    _
  %s12 = ssub.s32 1, %s10
  %s13 = scalar_select 0, %s12, %s10
  $region1: #{neuronet_forward.1} parent=0
    #allocation2 [shape = 'u8[32768]{0}', space=vmem, size = 0x8000, scoped, tag = 'input window, operand 1, single buffered']
    #allocation3 [shape = 's32[1]{0}', space=sflag, size = 0x4, scoped, tag = 'scoped memory for neuronet_forward.1']
    #allocation4 [shape = 'u8[131072]{0}', space=vmem, size = 0x20000, scoped, tag = 'input window, operand 3, single buffered']
    #allocation5 [shape = 's32[1]{0}', space=sflag, size = 0x4, scoped, tag = 'scoped memory for neuronet_forward.1']
    #allocation6 [shape = 'u8[65536]{0}', space=vmem, size = 0x10000, scoped, tag = 'input window, operand 5, single buffered']
    #allocation7 [shape = 'u8[65536]{0}', space=vmem, size = 0x10000, scoped, tag = 'input window, operand 7, single buffered']
    #allocation8 [shape = 's32[1]{0}', space=sflag, size = 0x4, scoped, tag = 'scoped memory for neuronet_forward.1']
    %14 = vsyncpa [#allocation3], 0
    %15 = vsyncpa [#allocation5], 0
    %16 = vsyncpa [#allocation8], 0
    // Predicated region
    $region2: #{neuronet_forward.1} parent=1 // pred_check
      _
    $region3: #{neuronet_forward.1} parent=1 // pred_check_branch
      %18 = sbr.rel (0) target = $region5
    $region4: #{neuronet_forward.1} parent=1 // pred_region
      _
    $region5: #{neuronet_forward.1} parent=1 // pred_fallthru
      _
    // Predicated region
    $region6: #{neuronet_forward.1} parent=1 // pred_check
      _
    $region7: #{neuronet_forward.1} parent=1 // pred_check_branch
      %20 = sbr.rel (0) target = $region9
    $region8: #{neuronet_forward.1} parent=1 // pred_region
      %s22 = ssub.s32 1024, 1024
      %23 = vsyncadd [#allocation3], %s22
      %s24 = sshll.u32 [#allocation2], 4
      %s25 = int_to_ptr.vmem [resolvable:$true] %s24
      %30 = dma.hbm_to_vmem [thread:$0]  %s1, 1024, %s25, [#allocation3], 64, 64, 4
    $region9: #{neuronet_forward.1} parent=1 // pred_fallthru
      _
    // Predicated region
    $region10: #{neuronet_forward.1} parent=1 // pred_check
      _
    $region11: #{neuronet_forward.1} parent=1 // pred_check_branch
      %32 = sbr.rel (0) target = $region13
    $region12: #{neuronet_forward.1} parent=1 // pred_region
      _
    $region13: #{neuronet_forward.1} parent=1 // pred_fallthru
      _
    // Predicated region
    $region14: #{neuronet_forward.1} parent=1 // pred_check
      _
    $region15: #{neuronet_forward.1} parent=1 // pred_check_branch
      %34 = sbr.rel (0) target = $region17
    $region16: #{neuronet_forward.1} parent=1 // pred_region
      %s36 = ssub.s32 4096, 4096
      %37 = vsyncadd [#allocation5], %s36
      %s38 = sshll.u32 [#allocation4], 4
      %s39 = int_to_ptr.vmem [resolvable:$true] %s38
      %44 = dma.hbm_to_vmem [thread:$0]  %s3, 4096, %s39, [#allocation5], 64, 64, 4
    $region17: #{neuronet_forward.1} parent=1 // pred_fallthru
      _
    // Predicated region
    $region18: #{neuronet_forward.1} parent=1 // pred_check
      _
    $region19: #{neuronet_forward.1} parent=1 // pred_check_branch
      %46 = sbr.rel (0) target = $region21
    $region20: #{neuronet_forward.1} parent=1 // pred_region
      _
    $region21: #{neuronet_forward.1} parent=1 // pred_fallthru
      _
    // Predicated region
    $region22: #{neuronet_forward.1} parent=1 // pred_check
      _
    $region23: #{neuronet_forward.1} parent=1 // pred_check_branch
      %48 = sbr.rel (0) target = $region25
    $region24: #{neuronet_forward.1} parent=1 // pred_region
      %s50 = ssub.s32 2048, 2048
      %51 = vsyncadd [#allocation5], %s50
      %s52 = sshll.u32 [#allocation6], 4
      %s53 = int_to_ptr.vmem [resolvable:$true] %s52
      %58 = dma.hbm_to_vmem [thread:$0]  %s5, 2048, %s53, [#allocation5], 128, 128, 8
    $region25: #{neuronet_forward.1} parent=1 // pred_fallthru
      _
    // Predicated region
    $region26: #{neuronet_forward.1} parent=1 // pred_check
      _
    $region27: #{neuronet_forward.1} parent=1 // pred_check_branch
      %60 = sbr.rel (0) target = $region29
    $region28: #{neuronet_forward.1} parent=1 // pred_region
      _
    $region29: #{neuronet_forward.1} parent=1 // pred_fallthru
      _
    // Predicated region
    $region30: #{neuronet_forward.1} parent=1 // pred_check
      _
    $region31: #{neuronet_forward.1} parent=1 // pred_check_branch
      %62 = sbr.rel (0) target = $region33
    $region32: #{neuronet_forward.1} parent=1 // pred_region
      %s64 = ssub.s32 2048, 2048
      %65 = vsyncadd [#allocation8], %s64
      %s66 = sshll.u32 [#allocation7], 4
      %s67 = int_to_ptr.vmem [resolvable:$true] %s66
      %72 = dma.hbm_to_vmem [thread:$0]  %s7, 2048, %s67, [#allocation8], 64, 64, 4
    $region33: #{neuronet_forward.1} parent=1 // pred_fallthru
      _
    // Predicated region
    $region34: #{neuronet_forward.1} parent=1 // pred_check
      _
    $region35: #{neuronet_forward.1} parent=1 // pred_check_branch
      %74 = sbr.rel (0) target = $region37
    $region36: #{neuronet_forward.1} parent=1 // pred_region
      _
    $region37: #{neuronet_forward.1} parent=1 // pred_fallthru
      _
    // Predicated region
    $region38: #{neuronet_forward.1} parent=1 // pred_check
      _
    $region39: #{neuronet_forward.1} parent=1 // pred_check_branch
      %76 = sbr.rel (0) target = $region41
    $region40: #{neuronet_forward.1} parent=1 // pred_region
      %77 = dma.done [#allocation3], 1024
    $region41: #{neuronet_forward.1} parent=1 // pred_fallthru
      _
    // Predicated region
    $region42: #{neuronet_forward.1} parent=1 // pred_check
      _
    $region43: #{neuronet_forward.1} parent=1 // pred_check_branch
      %79 = sbr.rel (0) target = $region45
    $region44: #{neuronet_forward.1} parent=1 // pred_region
      %80 = dma.done [#allocation5], 4096
    $region45: #{neuronet_forward.1} parent=1 // pred_fallthru
      _
    // Predicated region
    $region46: #{neuronet_forward.1} parent=1 // pred_check
      _
    $region47: #{neuronet_forward.1} parent=1 // pred_check_branch
      %82 = sbr.rel (0) target = $region49
    $region48: #{neuronet_forward.1} parent=1 // pred_region
      %83 = dma.done [#allocation5], 2048
    $region49: #{neuronet_forward.1} parent=1 // pred_fallthru
      _
    // Predicated region
    $region50: #{neuronet_forward.1} parent=1 // pred_check
      _
    $region51: #{neuronet_forward.1} parent=1 // pred_check_branch
      %85 = sbr.rel (0) target = $region53
    $region52: #{neuronet_forward.1} parent=1 // pred_region
      %86 = dma.done [#allocation8], 2048
    $region53: #{neuronet_forward.1} parent=1 // pred_fallthru
      _
    %v88 = vld [vmem:[%s0] sm:$0xf]
    %v89 = vld [vmem:[%s0 + $0x4] sm:$0xf]
    %v92 = vunpack.c.l.b16 %v88
    %v93 = vunpack.c.l.b16 %v89
    %v94 = vpack.c.b16 %v93, %v92
    %vm95 = vcmask 154624
    %v98 = vsel %vm95, %v94, 0
    %v100 = vld [vmem:[#allocation2] sm:$0xf]
    %v101 = vld [vmem:[#allocation2 + $0x4] sm:$0xf]
    %v102 = vld [vmem:[#allocation2 + $0x8] sm:$0xf]
    %v103 = vld [vmem:[#allocation2 + $0xc] sm:$0xf]
    %v104 = vld [vmem:[#allocation2 + $0x10] sm:$0xf]
    %v105 = vld [vmem:[#allocation2 + $0x14] sm:$0xf]
    %v106 = vld [vmem:[#allocation2 + $0x18] sm:$0xf]
    %v107 = vld [vmem:[#allocation2 + $0x1c] sm:$0xf]
    %v108 = vld [vmem:[#allocation2 + $0x20] sm:$0xf]
    %v109 = vld [vmem:[#allocation2 + $0x24] sm:$0xf]
    %v110 = vld [vmem:[#allocation2 + $0x28] sm:$0xf]
    %v111 = vld [vmem:[#allocation2 + $0x2c] sm:$0xf]
    %v112 = vld [vmem:[#allocation2 + $0x30] sm:$0xf]
    %v113 = vld [vmem:[#allocation2 + $0x34] sm:$0xf]
    %v114 = vld [vmem:[#allocation2 + $0x38] sm:$0xf]
    %v115 = vld [vmem:[#allocation2 + $0x3c] sm:$0xf]
    %v116 = vld [vmem:[%s2] sm:$0x1]
    %v118 = vlaneseq
    %v119 = vshrl.u32 %v118, 7
    %v120 = vsub.s32 0, %v119
    %v121 = vrot.slane %v116, %v120
    %v139 = vunpack.c.l.b16 %v100
    %v140 = vunpack.c.l.b16 %v101
    %v141 = vunpack.c.l.b16 %v102
    %v142 = vunpack.c.l.b16 %v103
    %v143 = vunpack.c.l.b16 %v104
    %v144 = vunpack.c.l.b16 %v105
    %v145 = vunpack.c.l.b16 %v106
    %v146 = vunpack.c.l.b16 %v107
    %v147 = vunpack.c.l.b16 %v108
    %v148 = vunpack.c.l.b16 %v109
    %v149 = vunpack.c.l.b16 %v110
    %v150 = vunpack.c.l.b16 %v111
    %v151 = vunpack.c.l.b16 %v112
    %v152 = vunpack.c.l.b16 %v113
    %v153 = vunpack.c.l.b16 %v114
    %v154 = vunpack.c.l.b16 %v115
    %v155 = vpack.c.b16 %v140, %v139
    %v156 = vpack.c.b16 %v142, %v141
    %v157 = vpack.c.b16 %v144, %v143
    %v158 = vpack.c.b16 %v146, %v145
    %v159 = vpack.c.b16 %v148, %v147
    %v160 = vpack.c.b16 %v150, %v149
    %v161 = vpack.c.b16 %v152, %v151
    %v162 = vpack.c.b16 %v154, %v153
    %171 = vmatprep.subr.bf16.mxu0 0
    %172 = vmatpush1.bf16.msra.mxu0 %v162
    %173 = vmatprep.subr.bf16.mxu0 0
    %174 = vmatpush1.bf16.msra.mxu0 %v161
    %175 = vmatprep.subr.bf16.mxu0 0
    %176 = vmatpush1.bf16.msra.mxu0 %v160
    %177 = vmatprep.subr.bf16.mxu0 0
    %178 = vmatpush1.bf16.msra.mxu0 %v159
    %179 = vmatprep.subr.bf16.mxu0 0
    %180 = vmatpush1.bf16.msra.mxu0 %v158
    %181 = vmatprep.subr.bf16.mxu0 0
    %182 = vmatpush1.bf16.msra.mxu0 %v157
    %183 = vmatprep.subr.bf16.mxu0 0
    %184 = vmatpush1.bf16.msra.mxu0 %v156
    %185 = vmatprep.subr.bf16.mxu0 0
    %186 = vmatpush1.bf16.msra.mxu0 %v155
    %187 = vmatprep.subr.bf16.mxu0 0
    %188 = vmatpush2.bf16.msra.mxu0 0
    %189 = vmatprep.subr.bf16.mxu0 0
    %190 = vmatpush2.bf16.msra.mxu0 0
    %191 = vmatprep.subr.bf16.mxu0 0
    %192 = vmatpush2.bf16.msra.mxu0 0
    %193 = vmatprep.subr.bf16.mxu0 0
    %194 = vmatpush2.bf16.msra.mxu0 0
    %195 = vmatprep.subr.bf16.mxu0 0
    %196 = vmatpush2.bf16.msra.mxu0 0
    %197 = vmatprep.subr.bf16.mxu0 0
    %198 = vmatpush2.bf16.msra.mxu0 0
    %199 = vmatprep.subr.bf16.mxu0 0
    %200 = vmatpush2.bf16.msra.mxu0 0
    %201 = vmatprep.subr.bf16.mxu0 0
    %202 = vmatpush2.bf16.msra.mxu0 0
    %203 = vmatprep.mubr.bf16.mxu0 0
    %204 = vmatmul.mubr.bf16.gmra.mxu0 %v98
    %v205 = vpop.f32.mrf.mxu0
    %v206 = vadd.f32 %v121, %v205
    %v207 = vpop.f32.mrf.mxu0
    %v208 = vpop.f32.mrf.mxu0
    %v209 = vadd.f32 %v121, %v208
    %v210 = vpop.f32.mrf.mxu0
    %211 = vdwg.mxu0
    %v212 = vmax.f32 %v206, 0.0
    %v213 = vmax.f32 %v209, 0.0
    %v214 = vpack.c.bf16 %v213, %v212
    %v215 = vld [vmem:[#allocation4] sm:$0xf]
    %v216 = vld [vmem:[#allocation4 + $0x4] sm:$0xf]
    %v217 = vld [vmem:[#allocation4 + $0x8] sm:$0xf]
    %v218 = vld [vmem:[#allocation4 + $0xc] sm:$0xf]
    %v219 = vld [vmem:[#allocation4 + $0x10] sm:$0xf]
    %v220 = vld [vmem:[#allocation4 + $0x14] sm:$0xf]
    %v221 = vld [vmem:[#allocation4 + $0x18] sm:$0xf]
    %v222 = vld [vmem:[#allocation4 + $0x1c] sm:$0xf]
    %v223 = vld [vmem:[#allocation4 + $0x20] sm:$0xf]
    %v224 = vld [vmem:[#allocation4 + $0x24] sm:$0xf]
    %v225 = vld [vmem:[#allocation4 + $0x28] sm:$0xf]
    %v226 = vld [vmem:[#allocation4 + $0x2c] sm:$0xf]
    %v227 = vld [vmem:[#allocation4 + $0x30] sm:$0xf]
    %v228 = vld [vmem:[#allocation4 + $0x34] sm:$0xf]
    %v229 = vld [vmem:[#allocation4 + $0x38] sm:$0xf]
    %v230 = vld [vmem:[#allocation4 + $0x3c] sm:$0xf]
    %v231 = vld [vmem:[%s4] sm:$0x1]
    %v233 = vlaneseq
    %v234 = vshrl.u32 %v233, 7
    %v235 = vsub.s32 0, %v234
    %v236 = vrot.slane %v231, %v235
    %v254 = vunpack.c.l.b16 %v215
    %v255 = vunpack.c.l.b16 %v216
    %v256 = vunpack.c.l.b16 %v217
    %v257 = vunpack.c.l.b16 %v218
    %v258 = vunpack.c.l.b16 %v219
    %v259 = vunpack.c.l.b16 %v220
    %v260 = vunpack.c.l.b16 %v221
    %v261 = vunpack.c.l.b16 %v222
    %v262 = vunpack.c.l.b16 %v223
    %v263 = vunpack.c.l.b16 %v224
    %v264 = vunpack.c.l.b16 %v225
    %v265 = vunpack.c.l.b16 %v226
    %v266 = vunpack.c.l.b16 %v227
    %v267 = vunpack.c.l.b16 %v228
    %v268 = vunpack.c.l.b16 %v229
    %v269 = vunpack.c.l.b16 %v230
    %v270 = vpack.c.b16 %v255, %v254
    %v271 = vpack.c.b16 %v257, %v256
    %v272 = vpack.c.b16 %v259, %v258
    %v273 = vpack.c.b16 %v261, %v260
    %v274 = vpack.c.b16 %v263, %v262
    %v275 = vpack.c.b16 %v265, %v264
    %v276 = vpack.c.b16 %v267, %v266
    %v277 = vpack.c.b16 %v269, %v268
    %286 = vmatprep.subr.bf16.mxu0 0
    %287 = vmatpush1.bf16.msra.mxu0 %v277
    %288 = vmatprep.subr.bf16.mxu0 0
    %289 = vmatpush1.bf16.msra.mxu0 %v276
    %290 = vmatprep.subr.bf16.mxu0 0
    %291 = vmatpush1.bf16.msra.mxu0 %v275
    %292 = vmatprep.subr.bf16.mxu0 0
    %293 = vmatpush1.bf16.msra.mxu0 %v274
    %294 = vmatprep.subr.bf16.mxu0 0
    %295 = vmatpush1.bf16.msra.mxu0 %v273
    %296 = vmatprep.subr.bf16.mxu0 0
    %297 = vmatpush1.bf16.msra.mxu0 %v272
    %298 = vmatprep.subr.bf16.mxu0 0
    %299 = vmatpush1.bf16.msra.mxu0 %v271
    %300 = vmatprep.subr.bf16.mxu0 0
    %301 = vmatpush1.bf16.msra.mxu0 %v270
    %302 = vmatprep.subr.bf16.mxu0 0
    %303 = vmatpush2.bf16.msra.mxu0 0
    %304 = vmatprep.subr.bf16.mxu0 0
    %305 = vmatpush2.bf16.msra.mxu0 0
    %306 = vmatprep.subr.bf16.mxu0 0
    %307 = vmatpush2.bf16.msra.mxu0 0
    %308 = vmatprep.subr.bf16.mxu0 0
    %309 = vmatpush2.bf16.msra.mxu0 0
    %310 = vmatprep.subr.bf16.mxu0 0
    %311 = vmatpush2.bf16.msra.mxu0 0
    %312 = vmatprep.subr.bf16.mxu0 0
    %313 = vmatpush2.bf16.msra.mxu0 0
    %314 = vmatprep.subr.bf16.mxu0 0
    %315 = vmatpush2.bf16.msra.mxu0 0
    %316 = vmatprep.subr.bf16.mxu0 0
    %317 = vmatpush2.bf16.msra.mxu0 0
    %318 = vmatprep.mubr.bf16.mxu0 0
    %319 = vmatmul.mubr.bf16.gmra.mxu0 %v214
    %v320 = vpop.f32.mrf.mxu0
    %v321 = vadd.f32 %v236, %v320
    %v322 = vpop.f32.mrf.mxu0
    %v323 = vpop.f32.mrf.mxu0
    %v324 = vadd.f32 %v236, %v323
    %v325 = vpop.f32.mrf.mxu0
    %326 = vdwg.mxu0
    %v327 = vmax.f32 %v321, 0.0
    %v328 = vmax.f32 %v324, 0.0
    %v329 = vpack.c.bf16 %v328, %v327
    %s330 = scalar_lea.vmem [#allocation4], 64
    %v331 = vld [vmem:[%s330] sm:$0xf]
    %v332 = vld [vmem:[%s330 + $0x4] sm:$0xf]
    %v333 = vld [vmem:[%s330 + $0x8] sm:$0xf]
    %v334 = vld [vmem:[%s330 + $0xc] sm:$0xf]
    %v335 = vld [vmem:[%s330 + $0x10] sm:$0xf]
    %v336 = vld [vmem:[%s330 + $0x14] sm:$0xf]
    %v337 = vld [vmem:[%s330 + $0x18] sm:$0xf]
    %v338 = vld [vmem:[%s330 + $0x1c] sm:$0xf]
    %v339 = vld [vmem:[%s330 + $0x20] sm:$0xf]
    %v340 = vld [vmem:[%s330 + $0x24] sm:$0xf]
    %v341 = vld [vmem:[%s330 + $0x28] sm:$0xf]
    %v342 = vld [vmem:[%s330 + $0x2c] sm:$0xf]
    %v343 = vld [vmem:[%s330 + $0x30] sm:$0xf]
    %v344 = vld [vmem:[%s330 + $0x34] sm:$0xf]
    %v345 = vld [vmem:[%s330 + $0x38] sm:$0xf]
    %v346 = vld [vmem:[%s330 + $0x3c] sm:$0xf]
    %s347 = scalar_lea.vmem %s4, 1
    %v348 = vld [vmem:[%s347] sm:$0x1]
    %v350 = vlaneseq
    %v351 = vshrl.u32 %v350, 7
    %v352 = vsub.s32 0, %v351
    %v353 = vrot.slane %v348, %v352
    %v371 = vunpack.c.l.b16 %v331
    %v372 = vunpack.c.l.b16 %v332
    %v373 = vunpack.c.l.b16 %v333
    %v374 = vunpack.c.l.b16 %v334
    %v375 = vunpack.c.l.b16 %v335
    %v376 = vunpack.c.l.b16 %v336
    %v377 = vunpack.c.l.b16 %v337
    %v378 = vunpack.c.l.b16 %v338
    %v379 = vunpack.c.l.b16 %v339
    %v380 = vunpack.c.l.b16 %v340
    %v381 = vunpack.c.l.b16 %v341
    %v382 = vunpack.c.l.b16 %v342
    %v383 = vunpack.c.l.b16 %v343
    %v384 = vunpack.c.l.b16 %v344
    %v385 = vunpack.c.l.b16 %v345
    %v386 = vunpack.c.l.b16 %v346
    %v387 = vpack.c.b16 %v372, %v371
    %v388 = vpack.c.b16 %v374, %v373
    %v389 = vpack.c.b16 %v376, %v375
    %v390 = vpack.c.b16 %v378, %v377
    %v391 = vpack.c.b16 %v380, %v379
    %v392 = vpack.c.b16 %v382, %v381
    %v393 = vpack.c.b16 %v384, %v383
    %v394 = vpack.c.b16 %v386, %v385
    %403 = vmatprep.subr.bf16.mxu0 0
    %404 = vmatpush1.bf16.msra.mxu0 %v394
    %405 = vmatprep.subr.bf16.mxu0 0
    %406 = vmatpush1.bf16.msra.mxu0 %v393
    %407 = vmatprep.subr.bf16.mxu0 0
    %408 = vmatpush1.bf16.msra.mxu0 %v392
    %409 = vmatprep.subr.bf16.mxu0 0
    %410 = vmatpush1.bf16.msra.mxu0 %v391
    %411 = vmatprep.subr.bf16.mxu0 0
    %412 = vmatpush1.bf16.msra.mxu0 %v390
    %413 = vmatprep.subr.bf16.mxu0 0
    %414 = vmatpush1.bf16.msra.mxu0 %v389
    %415 = vmatprep.subr.bf16.mxu0 0
    %416 = vmatpush1.bf16.msra.mxu0 %v388
    %417 = vmatprep.subr.bf16.mxu0 0
    %418 = vmatpush1.bf16.msra.mxu0 %v387
    %419 = vmatprep.subr.bf16.mxu0 0
    %420 = vmatpush2.bf16.msra.mxu0 0
    %421 = vmatprep.subr.bf16.mxu0 0
    %422 = vmatpush2.bf16.msra.mxu0 0
    %423 = vmatprep.subr.bf16.mxu0 0
    %424 = vmatpush2.bf16.msra.mxu0 0
    %425 = vmatprep.subr.bf16.mxu0 0
    %426 = vmatpush2.bf16.msra.mxu0 0
    %427 = vmatprep.subr.bf16.mxu0 0
    %428 = vmatpush2.bf16.msra.mxu0 0
    %429 = vmatprep.subr.bf16.mxu0 0
    %430 = vmatpush2.bf16.msra.mxu0 0
    %431 = vmatprep.subr.bf16.mxu0 0
    %432 = vmatpush2.bf16.msra.mxu0 0
    %433 = vmatprep.subr.bf16.mxu0 0
    %434 = vmatpush2.bf16.msra.mxu0 0
    %435 = vmatprep.mubr.bf16.mxu0 0
    %436 = vmatmul.mubr.bf16.gmra.mxu0 %v329
    %v437 = vpop.f32.mrf.mxu0
    %v438 = vadd.f32 %v353, %v437
    %v439 = vpop.f32.mrf.mxu0
    %v440 = vpop.f32.mrf.mxu0
    %v441 = vadd.f32 %v353, %v440
    %v442 = vpop.f32.mrf.mxu0
    %443 = vdwg.mxu0
    %v444 = vunpack.c.l.bf16 %v214
    %v445 = vunpack.c.h.bf16 %v214
    %v446 = vadd.f32 %v438, %v444
    %v447 = vadd.f32 %v441, %v445
    %v448 = vmax.f32 %v446, 0.0
    %v449 = vmax.f32 %v447, 0.0
    %v450 = vpack.c.bf16 %v449, %v448
    %s451 = scalar_lea.vmem [#allocation4], 128
    %v452 = vld [vmem:[%s451] sm:$0xf]
    %v453 = vld [vmem:[%s451 + $0x4] sm:$0xf]
    %v454 = vld [vmem:[%s451 + $0x8] sm:$0xf]
    %v455 = vld [vmem:[%s451 + $0xc] sm:$0xf]
    %v456 = vld [vmem:[%s451 + $0x10] sm:$0xf]
    %v457 = vld [vmem:[%s451 + $0x14] sm:$0xf]
    %v458 = vld [vmem:[%s451 + $0x18] sm:$0xf]
    %v459 = vld [vmem:[%s451 + $0x1c] sm:$0xf]
    %v460 = vld [vmem:[%s451 + $0x20] sm:$0xf]
    %v461 = vld [vmem:[%s451 + $0x24] sm:$0xf]
    %v462 = vld [vmem:[%s451 + $0x28] sm:$0xf]
    %v463 = vld [vmem:[%s451 + $0x2c] sm:$0xf]
    %v464 = vld [vmem:[%s451 + $0x30] sm:$0xf]
    %v465 = vld [vmem:[%s451 + $0x34] sm:$0xf]
    %v466 = vld [vmem:[%s451 + $0x38] sm:$0xf]
    %v467 = vld [vmem:[%s451 + $0x3c] sm:$0xf]
    %s468 = scalar_lea.vmem %s4, 2
    %v469 = vld [vmem:[%s468] sm:$0x1]
    %v471 = vlaneseq
    %v472 = vshrl.u32 %v471, 7
    %v473 = vsub.s32 0, %v472
    %v474 = vrot.slane %v469, %v473
    %v492 = vunpack.c.l.b16 %v452
    %v493 = vunpack.c.l.b16 %v453
    %v494 = vunpack.c.l.b16 %v454
    %v495 = vunpack.c.l.b16 %v455
    %v496 = vunpack.c.l.b16 %v456
    %v497 = vunpack.c.l.b16 %v457
    %v498 = vunpack.c.l.b16 %v458
    %v499 = vunpack.c.l.b16 %v459
    %v500 = vunpack.c.l.b16 %v460
    %v501 = vunpack.c.l.b16 %v461
    %v502 = vunpack.c.l.b16 %v462
    %v503 = vunpack.c.l.b16 %v463
    %v504 = vunpack.c.l.b16 %v464
    %v505 = vunpack.c.l.b16 %v465
    %v506 = vunpack.c.l.b16 %v466
    %v507 = vunpack.c.l.b16 %v467
    %v508 = vpack.c.b16 %v493, %v492
    %v509 = vpack.c.b16 %v495, %v494
    %v510 = vpack.c.b16 %v497, %v496
    %v511 = vpack.c.b16 %v499, %v498
    %v512 = vpack.c.b16 %v501, %v500
    %v513 = vpack.c.b16 %v503, %v502
    %v514 = vpack.c.b16 %v505, %v504
    %v515 = vpack.c.b16 %v507, %v506
    %524 = vmatprep.subr.bf16.mxu0 0
    %525 = vmatpush1.bf16.msra.mxu0 %v515
    %526 = vmatprep.subr.bf16.mxu0 0
    %527 = vmatpush1.bf16.msra.mxu0 %v514
    %528 = vmatprep.subr.bf16.mxu0 0
    %529 = vmatpush1.bf16.msra.mxu0 %v513
    %530 = vmatprep.subr.bf16.mxu0 0
    %531 = vmatpush1.bf16.msra.mxu0 %v512
    %532 = vmatprep.subr.bf16.mxu0 0
    %533 = vmatpush1.bf16.msra.mxu0 %v511
    %534 = vmatprep.subr.bf16.mxu0 0
    %535 = vmatpush1.bf16.msra.mxu0 %v510
    %536 = vmatprep.subr.bf16.mxu0 0
    %537 = vmatpush1.bf16.msra.mxu0 %v509
    %538 = vmatprep.subr.bf16.mxu0 0
    %539 = vmatpush1.bf16.msra.mxu0 %v508
    %540 = vmatprep.subr.bf16.mxu0 0
    %541 = vmatpush2.bf16.msra.mxu0 0
    %542 = vmatprep.subr.bf16.mxu0 0
    %543 = vmatpush2.bf16.msra.mxu0 0
    %544 = vmatprep.subr.bf16.mxu0 0
    %545 = vmatpush2.bf16.msra.mxu0 0
    %546 = vmatprep.subr.bf16.mxu0 0
    %547 = vmatpush2.bf16.msra.mxu0 0
    %548 = vmatprep.subr.bf16.mxu0 0
    %549 = vmatpush2.bf16.msra.mxu0 0
    %550 = vmatprep.subr.bf16.mxu0 0
    %551 = vmatpush2.bf16.msra.mxu0 0
    %552 = vmatprep.subr.bf16.mxu0 0
    %553 = vmatpush2.bf16.msra.mxu0 0
    %554 = vmatprep.subr.bf16.mxu0 0
    %555 = vmatpush2.bf16.msra.mxu0 0
    %556 = vmatprep.mubr.bf16.mxu0 0
    %557 = vmatmul.mubr.bf16.gmra.mxu0 %v450
    %v558 = vpop.f32.mrf.mxu0
    %v559 = vadd.f32 %v474, %v558
    %v560 = vpop.f32.mrf.mxu0
    %v561 = vpop.f32.mrf.mxu0
    %v562 = vadd.f32 %v474, %v561
    %v563 = vpop.f32.mrf.mxu0
    %564 = vdwg.mxu0
    %v565 = vmax.f32 %v559, 0.0
    %v566 = vmax.f32 %v562, 0.0
    %v567 = vpack.c.bf16 %v566, %v565
    %s568 = scalar_lea.vmem [#allocation4], 192
    %v569 = vld [vmem:[%s568] sm:$0xf]
    %v570 = vld [vmem:[%s568 + $0x4] sm:$0xf]
    %v571 = vld [vmem:[%s568 + $0x8] sm:$0xf]
    %v572 = vld [vmem:[%s568 + $0xc] sm:$0xf]
    %v573 = vld [vmem:[%s568 + $0x10] sm:$0xf]
    %v574 = vld [vmem:[%s568 + $0x14] sm:$0xf]
    %v575 = vld [vmem:[%s568 + $0x18] sm:$0xf]
    %v576 = vld [vmem:[%s568 + $0x1c] sm:$0xf]
    %v577 = vld [vmem:[%s568 + $0x20] sm:$0xf]
    %v578 = vld [vmem:[%s568 + $0x24] sm:$0xf]
    %v579 = vld [vmem:[%s568 + $0x28] sm:$0xf]
    %v580 = vld [vmem:[%s568 + $0x2c] sm:$0xf]
    %v581 = vld [vmem:[%s568 + $0x30] sm:$0xf]
    %v582 = vld [vmem:[%s568 + $0x34] sm:$0xf]
    %v583 = vld [vmem:[%s568 + $0x38] sm:$0xf]
    %v584 = vld [vmem:[%s568 + $0x3c] sm:$0xf]
    %s585 = scalar_lea.vmem %s4, 3
    %v586 = vld [vmem:[%s585] sm:$0x1]
    %v588 = vlaneseq
    %v589 = vshrl.u32 %v588, 7
    %v590 = vsub.s32 0, %v589
    %v591 = vrot.slane %v586, %v590
    %v609 = vunpack.c.l.b16 %v569
    %v610 = vunpack.c.l.b16 %v570
    %v611 = vunpack.c.l.b16 %v571
    %v612 = vunpack.c.l.b16 %v572
    %v613 = vunpack.c.l.b16 %v573
    %v614 = vunpack.c.l.b16 %v574
    %v615 = vunpack.c.l.b16 %v575
    %v616 = vunpack.c.l.b16 %v576
    %v617 = vunpack.c.l.b16 %v577
    %v618 = vunpack.c.l.b16 %v578
    %v619 = vunpack.c.l.b16 %v579
    %v620 = vunpack.c.l.b16 %v580
    %v621 = vunpack.c.l.b16 %v581
    %v622 = vunpack.c.l.b16 %v582
    %v623 = vunpack.c.l.b16 %v583
    %v624 = vunpack.c.l.b16 %v584
    %v625 = vpack.c.b16 %v610, %v609
    %v626 = vpack.c.b16 %v612, %v611
    %v627 = vpack.c.b16 %v614, %v613
    %v628 = vpack.c.b16 %v616, %v615
    %v629 = vpack.c.b16 %v618, %v617
    %v630 = vpack.c.b16 %v620, %v619
    %v631 = vpack.c.b16 %v622, %v621
    %v632 = vpack.c.b16 %v624, %v623
    %641 = vmatprep.subr.bf16.mxu0 0
    %642 = vmatpush1.bf16.msra.mxu0 %v632
    %643 = vmatprep.subr.bf16.mxu0 0
    %644 = vmatpush1.bf16.msra.mxu0 %v631
    %645 = vmatprep.subr.bf16.mxu0 0
    %646 = vmatpush1.bf16.msra.mxu0 %v630
    %647 = vmatprep.subr.bf16.mxu0 0
    %648 = vmatpush1.bf16.msra.mxu0 %v629
    %649 = vmatprep.subr.bf16.mxu0 0
    %650 = vmatpush1.bf16.msra.mxu0 %v628
    %651 = vmatprep.subr.bf16.mxu0 0
    %652 = vmatpush1.bf16.msra.mxu0 %v627
    %653 = vmatprep.subr.bf16.mxu0 0
    %654 = vmatpush1.bf16.msra.mxu0 %v626
    %655 = vmatprep.subr.bf16.mxu0 0
    %656 = vmatpush1.bf16.msra.mxu0 %v625
    %657 = vmatprep.subr.bf16.mxu0 0
    %658 = vmatpush2.bf16.msra.mxu0 0
    %659 = vmatprep.subr.bf16.mxu0 0
    %660 = vmatpush2.bf16.msra.mxu0 0
    %661 = vmatprep.subr.bf16.mxu0 0
    %662 = vmatpush2.bf16.msra.mxu0 0
    %663 = vmatprep.subr.bf16.mxu0 0
    %664 = vmatpush2.bf16.msra.mxu0 0
    %665 = vmatprep.subr.bf16.mxu0 0
    %666 = vmatpush2.bf16.msra.mxu0 0
    %667 = vmatprep.subr.bf16.mxu0 0
    %668 = vmatpush2.bf16.msra.mxu0 0
    %669 = vmatprep.subr.bf16.mxu0 0
    %670 = vmatpush2.bf16.msra.mxu0 0
    %671 = vmatprep.subr.bf16.mxu0 0
    %672 = vmatpush2.bf16.msra.mxu0 0
    %673 = vmatprep.mubr.bf16.mxu0 0
    %674 = vmatmul.mubr.bf16.gmra.mxu0 %v567
    %v675 = vpop.f32.mrf.mxu0
    %v676 = vadd.f32 %v591, %v675
    %v677 = vpop.f32.mrf.mxu0
    %v678 = vpop.f32.mrf.mxu0
    %v679 = vadd.f32 %v591, %v678
    %v680 = vpop.f32.mrf.mxu0
    %681 = vdwg.mxu0
    %v682 = vunpack.c.l.bf16 %v450
    %v683 = vunpack.c.h.bf16 %v450
    %v684 = vadd.f32 %v676, %v682
    %v685 = vadd.f32 %v679, %v683
    %v686 = vmax.f32 %v684, 0.0
    %v687 = vmax.f32 %v685, 0.0
    %v688 = vpack.c.bf16 %v687, %v686
    %v689 = vld [vmem:[#allocation6] sm:$0xff]
    %v690 = vld [vmem:[#allocation6 + $0x8] sm:$0xff]
    %v691 = vld [vmem:[#allocation6 + $0x10] sm:$0xff]
    %v692 = vld [vmem:[#allocation6 + $0x18] sm:$0xff]
    %v693 = vld [vmem:[#allocation6 + $0x20] sm:$0xff]
    %v694 = vld [vmem:[#allocation6 + $0x28] sm:$0xff]
    %v695 = vld [vmem:[#allocation6 + $0x30] sm:$0xff]
    %v696 = vld [vmem:[#allocation6 + $0x38] sm:$0xff]
    %v697 = vld [vmem:[#allocation6 + $0x40] sm:$0xff]
    %v698 = vld [vmem:[#allocation6 + $0x48] sm:$0xff]
    %v699 = vld [vmem:[#allocation6 + $0x50] sm:$0xff]
    %v700 = vld [vmem:[#allocation6 + $0x58] sm:$0xff]
    %v701 = vld [vmem:[#allocation6 + $0x60] sm:$0xff]
    %v702 = vld [vmem:[#allocation6 + $0x68] sm:$0xff]
    %v703 = vld [vmem:[#allocation6 + $0x70] sm:$0xff]
    %v704 = vld [vmem:[#allocation6 + $0x78] sm:$0xff]
    %v705 = vld [vmem:[%s6] sm:$0x3]
    %v707 = vlaneseq
    %v708 = vshrl.u32 %v707, 7
    %v709 = vsub.s32 0, %v708
    %v710 = vrot.slane %v705, %v709
    %v711 = vlaneseq
    %v712 = vshrl.u32 %v711, 7
    %v713 = vsub.s32 1, %v712
    %v714 = vrot.slane %v705, %v713
    %v733 = vunpack.c.l.b16 %v689
    %v734 = vunpack.c.h.b16 %v689
    %v735 = vunpack.c.l.b16 %v690
    %v736 = vunpack.c.h.b16 %v690
    %v737 = vunpack.c.l.b16 %v691
    %v738 = vunpack.c.h.b16 %v691
    %v739 = vunpack.c.l.b16 %v692
    %v740 = vunpack.c.h.b16 %v692
    %v741 = vunpack.c.l.b16 %v693
    %v742 = vunpack.c.h.b16 %v693
    %v743 = vunpack.c.l.b16 %v694
    %v744 = vunpack.c.h.b16 %v694
    %v745 = vunpack.c.l.b16 %v695
    %v746 = vunpack.c.h.b16 %v695
    %v747 = vunpack.c.l.b16 %v696
    %v748 = vunpack.c.h.b16 %v696
    %v749 = vunpack.c.l.b16 %v697
    %v750 = vunpack.c.h.b16 %v697
    %v751 = vunpack.c.l.b16 %v698
    %v752 = vunpack.c.h.b16 %v698
    %v753 = vunpack.c.l.b16 %v699
    %v754 = vunpack.c.h.b16 %v699
    %v755 = vunpack.c.l.b16 %v700
    %v756 = vunpack.c.h.b16 %v700
    %v757 = vunpack.c.l.b16 %v701
    %v758 = vunpack.c.h.b16 %v701
    %v759 = vunpack.c.l.b16 %v702
    %v760 = vunpack.c.h.b16 %v702
    %v761 = vunpack.c.l.b16 %v703
    %v762 = vunpack.c.h.b16 %v703
    %v763 = vunpack.c.l.b16 %v704
    %v764 = vunpack.c.h.b16 %v704
    %v765 = vpack.c.b16 %v735, %v733
    %v766 = vpack.c.b16 %v736, %v734
    %v767 = vpack.c.b16 %v739, %v737
    %v768 = vpack.c.b16 %v740, %v738
    %v769 = vpack.c.b16 %v743, %v741
    %v770 = vpack.c.b16 %v744, %v742
    %v771 = vpack.c.b16 %v747, %v745
    %v772 = vpack.c.b16 %v748, %v746
    %v773 = vpack.c.b16 %v751, %v749
    %v774 = vpack.c.b16 %v752, %v750
    %v775 = vpack.c.b16 %v755, %v753
    %v776 = vpack.c.b16 %v756, %v754
    %v777 = vpack.c.b16 %v759, %v757
    %v778 = vpack.c.b16 %v760, %v758
    %v779 = vpack.c.b16 %v763, %v761
    %v780 = vpack.c.b16 %v764, %v762
    %797 = vmatprep.subr.bf16.mxu0 %v780
    %798 = vmatpush1.bf16.msra.mxu0 %v779
    %799 = vmatprep.subr.bf16.mxu0 %v778
    %800 = vmatpush1.bf16.msra.mxu0 %v777
    %801 = vmatprep.subr.bf16.mxu0 %v776
    %802 = vmatpush1.bf16.msra.mxu0 %v775
    %803 = vmatprep.subr.bf16.mxu0 %v774
    %804 = vmatpush1.bf16.msra.mxu0 %v773
    %805 = vmatprep.subr.bf16.mxu0 %v772
    %806 = vmatpush1.bf16.msra.mxu0 %v771
    %807 = vmatprep.subr.bf16.mxu0 %v770
    %808 = vmatpush1.bf16.msra.mxu0 %v769
    %809 = vmatprep.subr.bf16.mxu0 %v768
    %810 = vmatpush1.bf16.msra.mxu0 %v767
    %811 = vmatprep.subr.bf16.mxu0 %v766
    %812 = vmatpush1.bf16.msra.mxu0 %v765
    %813 = vmatprep.subr.bf16.mxu0 0
    %814 = vmatpush2.bf16.msra.mxu0 0
    %815 = vmatprep.subr.bf16.mxu0 0
    %816 = vmatpush2.bf16.msra.mxu0 0
    %817 = vmatprep.subr.bf16.mxu0 0
    %818 = vmatpush2.bf16.msra.mxu0 0
    %819 = vmatprep.subr.bf16.mxu0 0
    %820 = vmatpush2.bf16.msra.mxu0 0
    %821 = vmatprep.subr.bf16.mxu0 0
    %822 = vmatpush2.bf16.msra.mxu0 0
    %823 = vmatprep.subr.bf16.mxu0 0
    %824 = vmatpush2.bf16.msra.mxu0 0
    %825 = vmatprep.subr.bf16.mxu0 0
    %826 = vmatpush2.bf16.msra.mxu0 0
    %827 = vmatprep.subr.bf16.mxu0 0
    %828 = vmatpush2.bf16.msra.mxu0 0
    %829 = vmatprep.mubr.bf16.mxu0 0
    %830 = vmatmul.mubr.bf16.gmra.mxu0 %v688
    %v831 = vpop.f32.mrf.mxu0
    %v832 = vadd.f32 %v710, %v831
    %v833 = vpop.f32.mrf.mxu0
    %v834 = vadd.f32 %v714, %v833
    %v835 = vpop.f32.mrf.mxu0
    %v836 = vadd.f32 %v710, %v835
    %v837 = vpop.f32.mrf.mxu0
    %v838 = vadd.f32 %v714, %v837
    %839 = vdwg.mxu0
    %v840 = vmax.f32 %v832, 0.0
    %v841 = vmax.f32 %v834, 0.0
    %v842 = vmax.f32 %v836, 0.0
    %v843 = vmax.f32 %v838, 0.0
    %v844 = vpack.c.bf16 %v842, %v840
    %v845 = vpack.c.bf16 %v843, %v841
    %v846 = vld [vmem:[#allocation7] sm:$0xf]
    %v847 = vld [vmem:[#allocation7 + $0x4] sm:$0xf]
    %v848 = vld [vmem:[#allocation7 + $0x8] sm:$0xf]
    %v849 = vld [vmem:[#allocation7 + $0xc] sm:$0xf]
    %v850 = vld [vmem:[#allocation7 + $0x10] sm:$0xf]
    %v851 = vld [vmem:[#allocation7 + $0x14] sm:$0xf]
    %v852 = vld [vmem:[#allocation7 + $0x18] sm:$0xf]
    %v853 = vld [vmem:[#allocation7 + $0x1c] sm:$0xf]
    %v854 = vld [vmem:[#allocation7 + $0x20] sm:$0xf]
    %v855 = vld [vmem:[#allocation7 + $0x24] sm:$0xf]
    %v856 = vld [vmem:[#allocation7 + $0x28] sm:$0xf]
    %v857 = vld [vmem:[#allocation7 + $0x2c] sm:$0xf]
    %v858 = vld [vmem:[#allocation7 + $0x30] sm:$0xf]
    %v859 = vld [vmem:[#allocation7 + $0x34] sm:$0xf]
    %v860 = vld [vmem:[#allocation7 + $0x38] sm:$0xf]
    %v861 = vld [vmem:[#allocation7 + $0x3c] sm:$0xf]
    %v862 = vld [vmem:[#allocation7 + $0x40] sm:$0xf]
    %v863 = vld [vmem:[#allocation7 + $0x44] sm:$0xf]
    %v864 = vld [vmem:[#allocation7 + $0x48] sm:$0xf]
    %v865 = vld [vmem:[#allocation7 + $0x4c] sm:$0xf]
    %v866 = vld [vmem:[#allocation7 + $0x50] sm:$0xf]
    %v867 = vld [vmem:[#allocation7 + $0x54] sm:$0xf]
    %v868 = vld [vmem:[#allocation7 + $0x58] sm:$0xf]
    %v869 = vld [vmem:[#allocation7 + $0x5c] sm:$0xf]
    %v870 = vld [vmem:[#allocation7 + $0x60] sm:$0xf]
    %v871 = vld [vmem:[#allocation7 + $0x64] sm:$0xf]
    %v872 = vld [vmem:[#allocation7 + $0x68] sm:$0xf]
    %v873 = vld [vmem:[#allocation7 + $0x6c] sm:$0xf]
    %v874 = vld [vmem:[#allocation7 + $0x70] sm:$0xf]
    %v875 = vld [vmem:[#allocation7 + $0x74] sm:$0xf]
    %v876 = vld [vmem:[#allocation7 + $0x78] sm:$0xf]
    %v877 = vld [vmem:[#allocation7 + $0x7c] sm:$0xf]
    %v878 = vld [vmem:[%s8] sm:$0x1]
    %v880 = vlaneseq
    %v881 = vshrl.u32 %v880, 7
    %v882 = vsub.s32 0, %v881
    %v883 = vrot.slane %v878, %v882
    %v917 = vunpack.c.l.b16 %v846
    %v918 = vunpack.c.l.b16 %v847
    %v919 = vunpack.c.l.b16 %v848
    %v920 = vunpack.c.l.b16 %v849
    %v921 = vunpack.c.l.b16 %v850
    %v922 = vunpack.c.l.b16 %v851
    %v923 = vunpack.c.l.b16 %v852
    %v924 = vunpack.c.l.b16 %v853
    %v925 = vunpack.c.l.b16 %v854
    %v926 = vunpack.c.l.b16 %v855
    %v927 = vunpack.c.l.b16 %v856
    %v928 = vunpack.c.l.b16 %v857
    %v929 = vunpack.c.l.b16 %v858
    %v930 = vunpack.c.l.b16 %v859
    %v931 = vunpack.c.l.b16 %v860
    %v932 = vunpack.c.l.b16 %v861
    %v933 = vunpack.c.l.b16 %v862
    %v934 = vunpack.c.l.b16 %v863
    %v935 = vunpack.c.l.b16 %v864
    %v936 = vunpack.c.l.b16 %v865
    %v937 = vunpack.c.l.b16 %v866
    %v938 = vunpack.c.l.b16 %v867
    %v939 = vunpack.c.l.b16 %v868
    %v940 = vunpack.c.l.b16 %v869
    %v941 = vunpack.c.l.b16 %v870
    %v942 = vunpack.c.l.b16 %v871
    %v943 = vunpack.c.l.b16 %v872
    %v944 = vunpack.c.l.b16 %v873
    %v945 = vunpack.c.l.b16 %v874
    %v946 = vunpack.c.l.b16 %v875
    %v947 = vunpack.c.l.b16 %v876
    %v948 = vunpack.c.l.b16 %v877
    %v949 = vpack.c.b16 %v918, %v917
    %v950 = vpack.c.b16 %v920, %v919
    %v951 = vpack.c.b16 %v922, %v921
    %v952 = vpack.c.b16 %v924, %v923
    %v953 = vpack.c.b16 %v926, %v925
    %v954 = vpack.c.b16 %v928, %v927
    %v955 = vpack.c.b16 %v930, %v929
    %v956 = vpack.c.b16 %v932, %v931
    %v957 = vpack.c.b16 %v934, %v933
    %v958 = vpack.c.b16 %v936, %v935
    %v959 = vpack.c.b16 %v938, %v937
    %v960 = vpack.c.b16 %v940, %v939
    %v961 = vpack.c.b16 %v942, %v941
    %v962 = vpack.c.b16 %v944, %v943
    %v963 = vpack.c.b16 %v946, %v945
    %v964 = vpack.c.b16 %v948, %v947
    %981 = vmatprep.subr.bf16.mxu0 0
    %982 = vmatpush1.bf16.msra.mxu0 %v956
    %983 = vmatprep.subr.bf16.mxu0 0
    %984 = vmatpush1.bf16.msra.mxu0 %v955
    %985 = vmatprep.subr.bf16.mxu0 0
    %986 = vmatpush1.bf16.msra.mxu0 %v954
    %987 = vmatprep.subr.bf16.mxu0 0
    %988 = vmatpush1.bf16.msra.mxu0 %v953
    %989 = vmatprep.subr.bf16.mxu0 0
    %990 = vmatpush1.bf16.msra.mxu0 %v952
    %991 = vmatprep.subr.bf16.mxu0 0
    %992 = vmatpush1.bf16.msra.mxu0 %v951
    %993 = vmatprep.subr.bf16.mxu0 0
    %994 = vmatpush1.bf16.msra.mxu0 %v950
    %995 = vmatprep.subr.bf16.mxu0 0
    %996 = vmatpush1.bf16.msra.mxu0 %v949
    %997 = vmatprep.subr.bf16.mxu0 0
    %998 = vmatpush2.bf16.msra.mxu0 %v964
    %999 = vmatprep.subr.bf16.mxu0 0
    %1000 = vmatpush2.bf16.msra.mxu0 %v963
    %1001 = vmatprep.subr.bf16.mxu0 0
    %1002 = vmatpush2.bf16.msra.mxu0 %v962
    %1003 = vmatprep.subr.bf16.mxu0 0
    %1004 = vmatpush2.bf16.msra.mxu0 %v961
    %1005 = vmatprep.subr.bf16.mxu0 0
    %1006 = vmatpush2.bf16.msra.mxu0 %v960
    %1007 = vmatprep.subr.bf16.mxu0 0
    %1008 = vmatpush2.bf16.msra.mxu0 %v959
    %1009 = vmatprep.subr.bf16.mxu0 0
    %1010 = vmatpush2.bf16.msra.mxu0 %v958
    %1011 = vmatprep.subr.bf16.mxu0 0
    %1012 = vmatpush2.bf16.msra.mxu0 %v957
    %1013 = vmatprep.mubr.bf16.mxu0 %v845
    %1014 = vmatmul.mubr.bf16.gmra.mxu0 %v844
    %v1015 = vpop.f32.mrf.mxu0
    %v1016 = vadd.f32 %v883, %v1015
    %v1017 = vpop.f32.mrf.mxu0
    %v1018 = vpop.f32.mrf.mxu0
    %v1019 = vadd.f32 %v883, %v1018
    %v1020 = vpop.f32.mrf.mxu0
    %1021 = vdwg.mxu0
    %v1022 = vpack.c.bf16 %v1019, %v1016
    %v1024 = vunpack.c.l.b16 %v1022
    %v1025 = vunpack.c.h.b16 %v1022
    %v1026 = vpack.c.b16 %v1024, %v1024
    %v1027 = vpack.c.b16 %v1025, %v1025
    %1030 = vst [vmem:[%s9] sm:$0xf] %v1026
    %1031 = vst [vmem:[%s9 + $0x4] sm:$0xf] %v1027
    // Predicated region
    $region54: #{neuronet_forward.1} parent=1 // pred_check
      _
    $region55: #{neuronet_forward.1} parent=1 // pred_check_branch
      %1033 = sbr.rel (0) target = $region57
    $region56: #{neuronet_forward.1} parent=1 // pred_region
      _
    $region57: #{neuronet_forward.1} parent=1 // pred_fallthru
      _
    // Predicated region
    $region58: #{neuronet_forward.1} parent=1 // pred_check
      _
    $region59: #{neuronet_forward.1} parent=1 // pred_check_branch
      %1035 = sbr.rel (0) target = $region61
    $region60: #{neuronet_forward.1} parent=1 // pred_region
      _
    $region61: #{neuronet_forward.1} parent=1 // pred_fallthru
      _
    %1036 = vsyncpa [#allocation3], 1
    %1037 = vsyncpa [#allocation5], 1
    %1038 = vsyncpa [#allocation8], 1

</llo_original>
